<compile_context>
chip_gen: v7x
topology: tpu7x:2x2x1
jax: 0.10.0
libtpu: 0.0.40
codegen_flags: <defaults>
</compile_context>

<pallas_src>
import functools

import jax
import jax.numpy as jnp
from jax import lax
from jax.experimental import pallas as pl
from jax.experimental.pallas import tpu as pltpu

LN_EPS = 1e-5


def _round_up(x, m):
    return ((x + m - 1) // m) * m


def _lane_pad(d):
    # Lane-dense padding. For large dims prefer 256-alignment (fills the
    # 256x256 MXU on v6e/v7x) since the relative padding cost is small.
    if _round_up(d, 128) >= 1024:
        return _round_up(d, 256)
    return _round_up(d, 128)


def _ffn_block_kernel(x_ref, w1_ref, b1_ref, w2_ref, b2_ref, g_ref, be_ref,
                      o_ref, acc_ref, *, d_true, d_pad):
    # Grid = (row tiles, F tiles).  x / out / acc blocks are constant along f.
    f = pl.program_id(1)

    @pl.when(f == 0)
    def _():
        acc_ref[...] = jnp.zeros_like(acc_ref)

    x = x_ref[...]  # keep native dtype -> MXU (bf16 path if inputs are bf16)

    # --- Linear1 + bias + ReLU, fused with the cast back to the weight dtype
    #     so the (tm, tf) f32 intermediate's live range is short.
    #     Dropout = identity in eval mode.
    h = jnp.maximum(
        jnp.dot(x, w1_ref[...], preferred_element_type=jnp.float32)
        + b1_ref[...].astype(jnp.float32), 0.0).astype(w2_ref.dtype)

    # --- Linear2 partial product accumulated over F tiles (f32 accumulator).
    acc_ref[...] += jnp.dot(h, w2_ref[...], preferred_element_type=jnp.float32)

    @pl.when(f == pl.num_programs(1) - 1)
    def _():
        # --- bias2 + residual + LayerNorm over the true feature width (f32).
        z = acc_ref[...] + b2_ref[...].astype(jnp.float32) + x.astype(jnp.float32)
        inv_d = jnp.float32(1.0 / d_true)
        mean = jnp.sum(z, axis=-1, keepdims=True) * inv_d
        zc = z - mean
        sum_sq = jnp.sum(zc * zc, axis=-1, keepdims=True)
        if d_pad != d_true:
            # Padded feature columns of z are exactly zero by construction, so
            # zc there equals -mean; remove their contribution analytically
            # instead of an iota/where mask (saves VPU ops).
            sum_sq = sum_sq - jnp.float32(d_pad - d_true) * mean * mean
        var = sum_sq * inv_d
        inv = lax.rsqrt(var + LN_EPS)
        y = (zc * inv * g_ref[...].astype(jnp.float32)
             + be_ref[...].astype(jnp.float32))
        o_ref[...] = y.astype(o_ref.dtype)


def feed_forward_block(seq, w1, b1, w2, b2, gamma, beta, *,
                       tm_max=512, min_f_tiles=1, vmem_frac=0.75):
    """seq: (N, T, D); w1: (D, F); b1: (F,); w2: (F, D); b2, gamma, beta: (D,).

    NOTE: any padded regions of the parameters must be zero (the wrapper
    guarantees this when it pads); nonzero padding would corrupt the LayerNorm.
    For unaligned D/F, callers should ideally pre-pad parameters once at
    param-prep time instead of per call.
    """
    N, T, D = seq.shape
    F = w1.shape[1]
    M = N * T
    act_dtype = seq.dtype
    asize = jnp.dtype(act_dtype).itemsize
    w_dtype = w1.dtype
    wsize = jnp.dtype(w_dtype).itemsize
    bsize = jnp.dtype(b1.dtype).itemsize

    D_pad = _lane_pad(D)
    F_pad = _lane_pad(F)

    # Per-core VMEM budget (per-core is also the right check under megacore
    # 'parallel' sharding, which duplicates resident weights per TensorCore).
    try:
        vmem_cap = int(pltpu.get_tpu_info().vmem_capacity_bytes)
    except Exception:
        vmem_cap = 64 * 1024 * 1024  # conservative (v7x per-TC)
    budget = int(vmem_frac * vmem_cap)

    # Row tile: multiple of 8 sublanes; allow bigger tiles on 128-MiB parts.
    if vmem_cap >= 100 * 1024 * 1024:
        tm_max = max(tm_max, 1024)
    tm = max(8, min(tm_max, _round_up(M, 8)))

    def _act_bytes(t, tf):
        # x + out tiles (double-buffered by the pipeline), f32 acc scratch,
        # transient f32 GEMM1 result + its weight-dtype cast, LN temporaries.
        return (2 * t * D_pad * asize
                + 2 * t * D_pad * asize
                + t * D_pad * 4
                + t * tf * (4 + wsize)
                + 2 * t * D_pad * 4)

    def _weight_bytes(tf, bufs):
        return (bufs * (2 * D_pad * tf * wsize + tf * bsize)
                + 3 * D_pad * 4)  # b2, gamma, beta (small)

    # Choose the F tiling: prefer fully-resident single-buffered weights; if
    # they don't fit the per-core budget, tile F (double-buffered weight tiles)
    # rather than shrinking tm below the MXU sweet spot.
    nf = F_pad // 128
    min_f = max(1, min(min_f_tiles, nf))
    grid_f = None
    tf = F_pad
    w_bufs = 1
    for g in range(1, nf + 1):
        if nf % g != 0 or g < min_f:
            continue
        tf_c = F_pad // g
        bufs = 1 if g == 1 else 2
        if _weight_bytes(tf_c, bufs) + _act_bytes(tm, tf_c) <= budget:
            grid_f, tf, w_bufs = g, tf_c, bufs
            break
    if grid_f is None:
        # Even the thinnest F slice doesn't fit -> shrink rows as a last resort.
        grid_f, tf = nf, 128
        w_bufs = 2 if nf > 1 else 1
        while tm > 8 and _weight_bytes(tf, w_bufs) + _act_bytes(tm, tf) > budget:
            tm = max(8, _round_up(tm // 2, 8))

    M_pad = _round_up(M, tm)
    grid_m = M_pad // tm

    # --- Build (possibly padded) operands; skip copies when already aligned.
    x2d = seq.reshape(M, D)
    if (M_pad != M) or (D_pad != D):
        x2d = jnp.zeros((M_pad, D_pad), act_dtype).at[:M, :D].set(x2d)

    if (D_pad != D) or (F_pad != F):
        w1p = jnp.zeros((D_pad, F_pad), w1.dtype).at[:D, :F].set(w1)
        w2p = jnp.zeros((F_pad, D_pad), w2.dtype).at[:F, :D].set(w2)
        b1p = jnp.zeros((1, F_pad), b1.dtype).at[0, :F].set(b1)
        b2p = jnp.zeros((1, D_pad), b2.dtype).at[0, :D].set(b2)
        gp = jnp.zeros((1, D_pad), gamma.dtype).at[0, :D].set(gamma)
        bp = jnp.zeros((1, D_pad), beta.dtype).at[0, :D].set(beta)
    else:
        w1p, w2p = w1, w2
        b1p = b1.reshape(1, F_pad)
        b2p = b2.reshape(1, D_pad)
        gp = gamma.reshape(1, D_pad)
        bp = beta.reshape(1, D_pad)

    need = _weight_bytes(tf, w_bufs) + _act_bytes(tm, tf)
    vmem_limit = int(min(vmem_cap, max(32 * 1024 * 1024, int(1.25 * need))))

    kernel = functools.partial(_ffn_block_kernel, d_true=D, d_pad=D_pad)

    wread = 1 if grid_f == 1 else grid_m
    cost = pl.CostEstimate(
        flops=int(4 * M_pad * D_pad * F_pad),
        transcendentals=int(M_pad),
        bytes_accessed=int(M_pad * D_pad * asize            # x read
                           + M_pad * D_pad * asize          # out write
                           + wread * 2 * D_pad * F_pad * wsize
                           + (F_pad + 3 * D_pad) * 4),
    )

    out2d = pl.pallas_call(
        kernel,
        out_shape=jax.ShapeDtypeStruct((M_pad, D_pad), act_dtype),
        grid_spec=pltpu.PrefetchScalarGridSpec(
            num_scalar_prefetch=0,
            grid=(grid_m, grid_f),
            in_specs=[
                # x row tile: constant along f -> resident across the F loop.
                pl.BlockSpec((tm, D_pad), lambda i, f: (i, 0)),
                # W1 / b1 / W2: F-tiled; single-buffered when fully resident.
                pl.BlockSpec((D_pad, tf), lambda i, f: (0, f),
                             pipeline_mode=pl.Buffered(w_bufs)),
                pl.BlockSpec((1, tf), lambda i, f: (0, f),
                             pipeline_mode=pl.Buffered(w_bufs)),
                pl.BlockSpec((tf, D_pad), lambda i, f: (f, 0),
                             pipeline_mode=pl.Buffered(w_bufs)),
                # b2 / gamma / beta: constant index -> single buffer.
                pl.BlockSpec((1, D_pad), lambda i, f: (0, 0),
                             pipeline_mode=pl.Buffered(1)),
                pl.BlockSpec((1, D_pad), lambda i, f: (0, 0),
                             pipeline_mode=pl.Buffered(1)),
                pl.BlockSpec((1, D_pad), lambda i, f: (0, 0),
                             pipeline_mode=pl.Buffered(1)),
            ],
            out_specs=pl.BlockSpec((tm, D_pad), lambda i, f: (i, 0)),
            scratch_shapes=[pltpu.VMEM((tm, D_pad), jnp.float32)],
        ),
        compiler_params=pltpu.CompilerParams(
            dimension_semantics=("parallel", "arbitrary"),
            vmem_limit_bytes=vmem_limit,
        ),
        cost_estimate=cost,
    )(x2d, w1p, b1p, w2p, b2p, gp, bp)

    if (M_pad != M) or (D_pad != D):
        out2d = out2d[:M, :D]
    return out2d.reshape(N, T, D)


def _reference(seq, w1, b1, w2, b2, gamma, beta):
    h = jnp.maximum(seq @ w1 + b1, 0.0)
    out = h @ w2 + b2
    z = out + seq
    mean = jnp.mean(z, axis=-1, keepdims=True)
    var = jnp.mean((z - mean) ** 2, axis=-1, keepdims=True)
    return (z - mean) / jnp.sqrt(var + LN_EPS) * gamma + beta


def _make_case(key, N, T, D, FF, dtype):
    k_x, k_w1, k_b1, k_w2, k_b2 = jax.random.split(key, 5)
    seq = jax.random.normal(k_x, (N, T, D), jnp.float32)
    lim1 = 1.0 / (D ** 0.5)
    lim2 = 1.0 / (FF ** 0.5)
    w1 = jax.random.uniform(k_w1, (D, FF), jnp.float32, -lim1, lim1)
    b1 = jax.random.uniform(k_b1, (FF,), jnp.float32, -lim1, lim1)
    w2 = jax.random.uniform(k_w2, (FF, D), jnp.float32, -lim2, lim2)
    b2 = jax.random.uniform(k_b2, (D,), jnp.float32, -lim2, lim2)
    gamma = jnp.ones((D,), jnp.float32)   # LayerNorm default init
    beta = jnp.zeros((D,), jnp.float32)
    seq, w1, b1, w2, b2 = (a.astype(dtype) for a in (seq, w1, b1, w2, b2))
    return seq, w1, b1, w2, b2, gamma, beta


if __name__ == "__main__":
    key = jax.random.PRNGKey(0)
    k1, k2, k3 = jax.random.split(key, 3)

    # Case 1: small module-consistent shapes (batch=2, seq=8, input_dim=32,
    # dim_feedforward=64) -> exercises the padded-feature path, resident weights.
    args = _make_case(k1, 2, 8, 32, 64, jnp.float32)
    y = feed_forward_block(*args)
    jax.block_until_ready(y)
    y_ref = _reference(*args)
    assert y.shape == (2, 8, 32)
    assert jnp.allclose(y, y_ref, atol=1e-5, rtol=1e-5), "case1 mismatch"

    # Case 2: lane-aligned shapes (D=128, F=256) with forced F-tiling ->
    # exercises the pad-skip path and the F-accumulator fallback.
    args2 = _make_case(k2, 2, 8, 128, 256, jnp.float32)
    y2 = feed_forward_block(*args2, min_f_tiles=2)
    jax.block_until_ready(y2)
    y2_ref = _reference(*args2)
    assert jnp.allclose(y2, y2_ref, atol=1e-5, rtol=1e-5), "case2 mismatch"

    # Case 3: bf16 activations/weights through the MXU with f32 LayerNorm math.
    args3 = _make_case(k3, 2, 8, 32, 64, jnp.bfloat16)
    y3 = feed_forward_block(*args3)
    jax.block_until_ready(y3)
    args3_f32 = tuple(a.astype(jnp.float32) for a in args3)
    y3_ref = _reference(*args3_f32)
    err = jnp.max(jnp.abs(y3.astype(jnp.float32) - y3_ref))
    assert err < 5e-2, f"case3 (bf16) mismatch, max err {err}"

    print("KERNEL_OK")
</pallas_src>

<mosaic_0001>
module attributes {stable_mosaic.version = 11 : i64} {
  func.func @_ffn_block_kernel(%arg0: i32, %arg1: i32, %arg2: memref<16x128xf32, #tpu.memory_space<vmem>>, %arg3: memref<128x128xf32, #tpu.memory_space<vmem>>, %arg4: memref<1x128xf32, #tpu.memory_space<vmem>>, %arg5: memref<128x128xf32, #tpu.memory_space<vmem>>, %arg6: memref<1x128xf32, #tpu.memory_space<vmem>>, %arg7: memref<1x128xf32, #tpu.memory_space<vmem>>, %arg8: memref<1x128xf32, #tpu.memory_space<vmem>>, %arg9: memref<16x128xf32, #tpu.memory_space<vmem>>, %arg10: memref<16x128xf32, #tpu.memory_space<vmem>>) attributes {dimension_semantics = [#tpu.dimension_semantics<parallel>, #tpu.dimension_semantics<arbitrary>], iteration_bounds = array<i64: 1, 1>, scalar_prefetch = 0 : i64, scratch_operands = 1 : i64, tpu.core_type = #tpu.core_type<tc>, window_params = [{transform_indices = @transform_0, window_bounds = array<i64: 16, 128>}, {pipeline_mode = #tpu.pipeline_mode<synchronous>, transform_indices = @transform_1, window_bounds = array<i64: 128, 128>}, {pipeline_mode = #tpu.pipeline_mode<synchronous>, transform_indices = @transform_2, window_bounds = array<i64: 1, 128>}, {pipeline_mode = #tpu.pipeline_mode<synchronous>, transform_indices = @transform_3, window_bounds = array<i64: 128, 128>}, {pipeline_mode = #tpu.pipeline_mode<synchronous>, transform_indices = @transform_4, window_bounds = array<i64: 1, 128>}, {pipeline_mode = #tpu.pipeline_mode<synchronous>, transform_indices = @transform_5, window_bounds = array<i64: 1, 128>}, {pipeline_mode = #tpu.pipeline_mode<synchronous>, transform_indices = @transform_6, window_bounds = array<i64: 1, 128>}, {transform_indices = @transform_7, window_bounds = array<i64: 16, 128>}]} {
    %c0_i32 = arith.constant 0 : i32
    %0 = arith.cmpi eq, %arg1, %c0_i32 : i32
    %1 = arith.extui %0 : i1 to i32
    %c0_i32_0 = arith.constant 0 : i32
    %2 = arith.cmpi ne, %1, %c0_i32_0 : i32
    scf.if %2 {
      %cst_16 = arith.constant 0.000000e+00 : f32
      %19 = vector.broadcast %cst_16 : f32 to vector<16x128xf32>
      %c0_17 = arith.constant 0 : index
      %c0_18 = arith.constant 0 : index
      %20 = vector.load %arg10[%c0_17, %c0_18] : memref<16x128xf32, #tpu.memory_space<vmem>>, vector<16x128xf32>
      tpu.vector_store %arg10[%c0_17, %c0_18], %19 {strides = array<i32>} : memref<16x128xf32, #tpu.memory_space<vmem>>, vector<16x128xf32>,
    } else {
    }
    %c0 = arith.constant 0 : index
    %c0_1 = arith.constant 0 : index
    %3 = vector.load %arg2[%c0, %c0_1] : memref<16x128xf32, #tpu.memory_space<vmem>>, vector<16x128xf32>
    %c0_2 = arith.constant 0 : index
    %c0_3 = arith.constant 0 : index
    %4 = vector.load %arg3[%c0_2, %c0_3] : memref<128x128xf32, #tpu.memory_space<vmem>>, vector<128x128xf32>
    %cst = arith.constant dense<0.000000e+00> : vector<16x128xf32>
    %5 = tpu.matmul %3, %4, %cst {dimension_numbers = #tpu.dot_dimension_numbers<[1], [0], [0], [1], [0, 0, 1, 1], [], []>} : vector<16x128xf32>, vector<128x128xf32>, vector<16x128xf32> -> vector<16x128xf32>
    %c0_4 = arith.constant 0 : index
    %c0_5 = arith.constant 0 : index
    %6 = vector.load %arg4[%c0_4, %c0_5] : memref<1x128xf32, #tpu.memory_space<vmem>>, vector<1x128xf32>
    %7 = vector.broadcast %6 : vector<1x128xf32> to vector<16x128xf32>
    %8 = arith.addf %5, %7 : vector<16x128xf32>
    %cst_6 = arith.constant 0.000000e+00 : f32
    %9 = vector.broadcast %cst_6 : f32 to vector<16x128xf32>
    %10 = arith.maximumf %8, %9 : vector<16x128xf32>
    %c0_7 = arith.constant 0 : index
    %c0_8 = arith.constant 0 : index
    %11 = vector.load %arg10[%c0_7, %c0_8] : memref<16x128xf32, #tpu.memory_space<vmem>>, vector<16x128xf32>
    %c0_9 = arith.constant 0 : index
    %c0_10 = arith.constant 0 : index
    %12 = vector.load %arg5[%c0_9, %c0_10] : memref<128x128xf32, #tpu.memory_space<vmem>>, vector<128x128xf32>
    %cst_11 = arith.constant dense<0.000000e+00> : vector<16x128xf32>
    %13 = tpu.matmul %10, %12, %cst_11 {dimension_numbers = #tpu.dot_dimension_numbers<[1], [0], [0], [1], [0, 0, 1, 1], [], []>} : vector<16x128xf32>, vector<128x128xf32>, vector<16x128xf32> -> vector<16x128xf32>
    %14 = arith.addf %11, %13 : vector<16x128xf32>
    %c0_12 = arith.constant 0 : index
    %c0_13 = arith.constant 0 : index
    %15 = vector.load %arg10[%c0_12, %c0_13] : memref<16x128xf32, #tpu.memory_space<vmem>>, vector<16x128xf32>
    tpu.vector_store %arg10[%c0_12, %c0_13], %14 {strides = array<i32>} : memref<16x128xf32, #tpu.memory_space<vmem>>, vector<16x128xf32>,
    %c0_i32_14 = arith.constant 0 : i32
    %16 = arith.cmpi eq, %arg1, %c0_i32_14 : i32
    %17 = arith.extui %16 : i1 to i32
    %c0_i32_15 = arith.constant 0 : i32
    %18 = arith.cmpi ne, %17, %c0_i32_15 : i32
    scf.if %18 {
      %c0_16 = arith.constant 0 : index
      %c0_17 = arith.constant 0 : index
      %19 = vector.load %arg10[%c0_16, %c0_17] : memref<16x128xf32, #tpu.memory_space<vmem>>, vector<16x128xf32>
      %c0_18 = arith.constant 0 : index
      %c0_19 = arith.constant 0 : index
      %20 = vector.load %arg6[%c0_18, %c0_19] : memref<1x128xf32, #tpu.memory_space<vmem>>, vector<1x128xf32>
      %21 = vector.broadcast %20 : vector<1x128xf32> to vector<16x128xf32>
      %22 = arith.addf %19, %21 : vector<16x128xf32>
      %23 = arith.addf %22, %3 : vector<16x128xf32>
      %cst_20 = arith.constant dense<0.000000e+00> : vector<16xf32>
      %24 = vector.multi_reduction <add>, %23, %cst_20 [1] : vector<16x128xf32> to vector<16xf32>
      %25 = vector.shape_cast %24 : vector<16xf32> to vector<16x1xf32>
      %cst_21 = arith.constant 3.125000e-02 : f32
      %26 = vector.broadcast %cst_21 : f32 to vector<16x1xf32>
      %27 = arith.mulf %25, %26 : vector<16x1xf32>
      %28 = vector.broadcast %27 : vector<16x1xf32> to vector<16x128xf32>
      %29 = arith.subf %23, %28 : vector<16x128xf32>
      %30 = arith.mulf %29, %29 : vector<16x128xf32>
      %cst_22 = arith.constant dense<0.000000e+00> : vector<16xf32>
      %31 = vector.multi_reduction <add>, %30, %cst_22 [1] : vector<16x128xf32> to vector<16xf32>
      %32 = vector.shape_cast %31 : vector<16xf32> to vector<16x1xf32>
      %cst_23 = arith.constant 9.600000e+01 : f32
      %33 = vector.broadcast %cst_23 : f32 to vector<16x1xf32>
      %34 = arith.mulf %33, %27 : vector<16x1xf32>
      %35 = arith.mulf %34, %27 : vector<16x1xf32>
      %36 = arith.subf %32, %35 : vector<16x1xf32>
      %cst_24 = arith.constant 3.125000e-02 : f32
      %37 = vector.broadcast %cst_24 : f32 to vector<16x1xf32>
      %38 = arith.mulf %36, %37 : vector<16x1xf32>
      %cst_25 = arith.constant 9.99999974E-6 : f32
      %39 = vector.broadcast %cst_25 : f32 to vector<16x1xf32>
      %40 = arith.addf %38, %39 : vector<16x1xf32>
      %41 = math.rsqrt %40 : vector<16x1xf32>
      %42 = vector.broadcast %41 : vector<16x1xf32> to vector<16x128xf32>
      %43 = arith.mulf %29, %42 : vector<16x128xf32>
      %c0_26 = arith.constant 0 : index
      %c0_27 = arith.constant 0 : index
      %44 = vector.load %arg7[%c0_26, %c0_27] : memref<1x128xf32, #tpu.memory_space<vmem>>, vector<1x128xf32>
      %45 = vector.broadcast %44 : vector<1x128xf32> to vector<16x128xf32>
      %46 = arith.mulf %43, %45 : vector<16x128xf32>
      %c0_28 = arith.constant 0 : index
      %c0_29 = arith.constant 0 : index
      %47 = vector.load %arg8[%c0_28, %c0_29] : memref<1x128xf32, #tpu.memory_space<vmem>>, vector<1x128xf32>
      %48 = vector.broadcast %47 : vector<1x128xf32> to vector<16x128xf32>
      %49 = arith.addf %46, %48 : vector<16x128xf32>
      %c0_30 = arith.constant 0 : index
      %c0_31 = arith.constant 0 : index
      %50 = vector.load %arg9[%c0_30, %c0_31] : memref<16x128xf32, #tpu.memory_space<vmem>>, vector<16x128xf32>
      tpu.vector_store %arg9[%c0_30, %c0_31], %49 {strides = array<i32>} : memref<16x128xf32, #tpu.memory_space<vmem>>, vector<16x128xf32>,
    } else {
    }
    return
  }
  func.func @transform_0(%arg0: i32, %arg1: i32) -> (i32, i32) {
    %c0_i32 = arith.constant 0 : i32
    %c0_i32_0 = arith.constant 0 : i32
    return %arg0, %c0_i32 : i32, i32
  }
  func.func @transform_1(%arg0: i32, %arg1: i32) -> (i32, i32) {
    %c0_i32 = arith.constant 0 : i32
    %c0_i32_0 = arith.constant 0 : i32
    return %c0_i32, %arg1 : i32, i32
  }
  func.func @transform_2(%arg0: i32, %arg1: i32) -> (i32, i32) {
    %c0_i32 = arith.constant 0 : i32
    %c0_i32_0 = arith.constant 0 : i32
    return %c0_i32, %arg1 : i32, i32
  }
  func.func @transform_3(%arg0: i32, %arg1: i32) -> (i32, i32) {
    %c0_i32 = arith.constant 0 : i32
    %c0_i32_0 = arith.constant 0 : i32
    return %arg1, %c0_i32 : i32, i32
  }
  func.func @transform_4(%arg0: i32, %arg1: i32) -> (i32, i32) {
    %c0_i32 = arith.constant 0 : i32
    %c0_i32_0 = arith.constant 0 : i32
    %c0_i32_1 = arith.constant 0 : i32
    return %c0_i32, %c0_i32_0 : i32, i32
  }
  func.func @transform_5(%arg0: i32, %arg1: i32) -> (i32, i32) {
    %c0_i32 = arith.constant 0 : i32
    %c0_i32_0 = arith.constant 0 : i32
    %c0_i32_1 = arith.constant 0 : i32
    return %c0_i32, %c0_i32_0 : i32, i32
  }
  func.func @transform_6(%arg0: i32, %arg1: i32) -> (i32, i32) {
    %c0_i32 = arith.constant 0 : i32
    %c0_i32_0 = arith.constant 0 : i32
    %c0_i32_1 = arith.constant 0 : i32
    return %c0_i32, %c0_i32_0 : i32, i32
  }
  func.func @transform_7(%arg0: i32, %arg1: i32) -> (i32, i32) {
    %c0_i32 = arith.constant 0 : i32
    %c0_i32_0 = arith.constant 0 : i32
    return %arg0, %c0_i32 : i32, i32
  }
}

</mosaic_0001>

<llo_original>
// kernel: tpu_custom_call.1
$region0: #{tpu_custom_call.1}
  #allocation0 [shape = 'u32[]', space=smem, size = 0x4, offset = 0x4, fixed_abs, tag = 'smem constant byte address 0x4 - core index']
  #allocation1 [shape = 'u32[144,128]{1,0:T(1,128)}', space=vmem, size = 0x12000, scoped, tag = 'internal scratch']
  #allocation2 [shape = 'f32[16,128]{1,0:T(8,128)}', space=vmem, size = 0x2000, scoped, tag = 'scratch operand']
  %s0 = inlined_call_operand.hbm [shape: f32[16,128], index: 0, kind: input, shape index: {}]
  %s1 = inlined_call_operand.hbm [shape: f32[128,128], index: 1, kind: input, shape index: {}]
  %s2 = inlined_call_operand.vmem [shape: f32[1,128], index: 2, kind: input, shape index: {}]
  %s3 = inlined_call_operand.hbm [shape: f32[128,128], index: 3, kind: input, shape index: {}]
  %s4 = inlined_call_operand.vmem [shape: f32[1,128], index: 4, kind: input, shape index: {}]
  %s5 = inlined_call_operand.vmem [shape: f32[1,128], index: 5, kind: input, shape index: {}]
  %s6 = inlined_call_operand.vmem [shape: f32[1,128], index: 6, kind: input, shape index: {}]
  %s7 = inlined_call_operand.hbm [shape: f32[16,128], index: 7, kind: output, shape index: {}]
  %s8 = sld [smem:[#allocation0]]
  $region58: #{tpu_custom_call.1} parent=0
    _
  %s10 = ssub.s32 1, %s8
  %s11 = scalar_select 0, %s10, %s8
  $region1: #{tpu_custom_call.1} parent=0
    #allocation3 [shape = 'u8[8192]{0}', space=vmem, size = 0x2000, scoped, tag = 'input window, operand 0, single buffered']
    #allocation4 [shape = 's32[1]{0}', space=sflag, size = 0x4, scoped, tag = 'scoped memory for tpu_custom_call.1']
    #allocation5 [shape = 's32[1]{0}', space=sflag, size = 0x4, scoped, tag = 'scoped memory for tpu_custom_call.1']
    #allocation6 [shape = 'u8[65536]{0}', space=vmem, size = 0x10000, scoped, tag = 'input window, operand 1, single buffered']
    #allocation7 [shape = 's32[1]{0}', space=sflag, size = 0x4, scoped, tag = 'scoped memory for tpu_custom_call.1']
    #allocation8 [shape = 'u8[65536]{0}', space=vmem, size = 0x10000, scoped, tag = 'input window, operand 3, single buffered']
    #allocation9 [shape = 'u8[8192]{0}', space=vmem, size = 0x2000, scoped, tag = 'output window, operand 0, single buffered']
    %12 = vsyncpa [#allocation4], 0
    %13 = vsyncpa [#allocation7], 0
    %14 = vsyncpa [#allocation5], 0
    // Predicated region
    $region2: #{tpu_custom_call.1} parent=1 // pred_check
      _
    $region3: #{tpu_custom_call.1} parent=1 // pred_check_branch
      %16 = sbr.rel (0) target = $region5
    $region4: #{tpu_custom_call.1} parent=1 // pred_region
      %s18 = ssub.s32 256, 256
      %19 = vsyncadd [#allocation4], %s18
      %s20 = sshll.u32 [#allocation3], 4
      %s21 = int_to_ptr.vmem [resolvable:$true] %s20
      %26 = dma.hbm_to_vmem [thread:$0]  %s0, 256, %s21, [#allocation4], 128, 128, 8
    $region5: #{tpu_custom_call.1} parent=1 // pred_fallthru
      _
    // Predicated region
    $region6: #{tpu_custom_call.1} parent=1 // pred_check
      _
    $region7: #{tpu_custom_call.1} parent=1 // pred_check_branch
      %28 = sbr.rel (0) target = $region9
    $region8: #{tpu_custom_call.1} parent=1 // pred_region
      %s30 = ssub.s32 2048, 2048
      %31 = vsyncadd [#allocation7], %s30
      %s32 = sshll.u32 [#allocation6], 4
      %s33 = int_to_ptr.vmem [resolvable:$true] %s32
      %38 = dma.hbm_to_vmem [thread:$0]  %s1, 2048, %s33, [#allocation7], 128, 128, 8
    $region9: #{tpu_custom_call.1} parent=1 // pred_fallthru
      _
    // Predicated region
    $region10: #{tpu_custom_call.1} parent=1 // pred_check
      _
    $region11: #{tpu_custom_call.1} parent=1 // pred_check_branch
      %40 = sbr.rel (0) target = $region13
    $region12: #{tpu_custom_call.1} parent=1 // pred_region
      _
    $region13: #{tpu_custom_call.1} parent=1 // pred_fallthru
      _
    // Predicated region
    $region14: #{tpu_custom_call.1} parent=1 // pred_check
      _
    $region15: #{tpu_custom_call.1} parent=1 // pred_check_branch
      %42 = sbr.rel (0) target = $region17
    $region16: #{tpu_custom_call.1} parent=1 // pred_region
      %s44 = ssub.s32 2048, 2048
      %45 = vsyncadd [#allocation7], %s44
      %s46 = sshll.u32 [#allocation8], 4
      %s47 = int_to_ptr.vmem [resolvable:$true] %s46
      %52 = dma.hbm_to_vmem [thread:$0]  %s3, 2048, %s47, [#allocation7], 128, 128, 8
    $region17: #{tpu_custom_call.1} parent=1 // pred_fallthru
      _
    // Predicated region
    $region18: #{tpu_custom_call.1} parent=1 // pred_check
      _
    $region19: #{tpu_custom_call.1} parent=1 // pred_check_branch
      %54 = sbr.rel (0) target = $region21
    $region20: #{tpu_custom_call.1} parent=1 // pred_region
      _
    $region21: #{tpu_custom_call.1} parent=1 // pred_fallthru
      _
    // Predicated region
    $region22: #{tpu_custom_call.1} parent=1 // pred_check
      _
    $region23: #{tpu_custom_call.1} parent=1 // pred_check_branch
      %56 = sbr.rel (0) target = $region25
    $region24: #{tpu_custom_call.1} parent=1 // pred_region
      _
    $region25: #{tpu_custom_call.1} parent=1 // pred_fallthru
      _
    // Predicated region
    $region26: #{tpu_custom_call.1} parent=1 // pred_check
      _
    $region27: #{tpu_custom_call.1} parent=1 // pred_check_branch
      %58 = sbr.rel (0) target = $region29
    $region28: #{tpu_custom_call.1} parent=1 // pred_region
      _
    $region29: #{tpu_custom_call.1} parent=1 // pred_fallthru
      _
    // Predicated region
    $region30: #{tpu_custom_call.1} parent=1 // pred_check
      _
    $region31: #{tpu_custom_call.1} parent=1 // pred_check_branch
      %60 = sbr.rel (0) target = $region33
    $region32: #{tpu_custom_call.1} parent=1 // pred_region
      %61 = dma.done [#allocation4], 256
    $region33: #{tpu_custom_call.1} parent=1 // pred_fallthru
      _
    // Predicated region
    $region34: #{tpu_custom_call.1} parent=1 // pred_check
      _
    $region35: #{tpu_custom_call.1} parent=1 // pred_check_branch
      %63 = sbr.rel (0) target = $region37
    $region36: #{tpu_custom_call.1} parent=1 // pred_region
      %64 = dma.done [#allocation7], 2048
    $region37: #{tpu_custom_call.1} parent=1 // pred_fallthru
      _
    // Predicated region
    $region38: #{tpu_custom_call.1} parent=1 // pred_check
      _
    $region39: #{tpu_custom_call.1} parent=1 // pred_check_branch
      %66 = sbr.rel (0) target = $region41
    $region40: #{tpu_custom_call.1} parent=1 // pred_region
      %67 = dma.done [#allocation7], 2048
    $region41: #{tpu_custom_call.1} parent=1 // pred_fallthru
      _
    %p68 = scmp.eq.s32.totalorder 0, 0
    // Predicated region
    $region42: #{tpu_custom_call.1} parent=1 // pred_check
      %p69 = pneg %p68
    $region43: #{tpu_custom_call.1} parent=1 // pred_check_branch
      %71 = sbr.rel (%p69) target = $region45
    $region44: #{tpu_custom_call.1} parent=1 // pred_region
      %72 = vst [vmem:[#allocation2] sm:$0xff] 0.0
      %73 = vst [vmem:[#allocation2 + $0x8] sm:$0xff] 0.0
    $region45: #{tpu_custom_call.1} parent=1 // pred_fallthru
      _
    %v74 = vld [vmem:[#allocation3] sm:$0xff]
    %v75 = vld [vmem:[#allocation3 + $0x8] sm:$0xff]
    %v76 = vld [vmem:[#allocation6] sm:$0xff]
    %v77 = vld [vmem:[#allocation6 + $0x8] sm:$0xff]
    %v78 = vld [vmem:[#allocation6 + $0x10] sm:$0xff]
    %v79 = vld [vmem:[#allocation6 + $0x18] sm:$0xff]
    %v80 = vld [vmem:[#allocation6 + $0x20] sm:$0xff]
    %v81 = vld [vmem:[#allocation6 + $0x28] sm:$0xff]
    %v82 = vld [vmem:[#allocation6 + $0x30] sm:$0xff]
    %v83 = vld [vmem:[#allocation6 + $0x38] sm:$0xff]
    %v84 = vld [vmem:[#allocation6 + $0x40] sm:$0xff]
    %v85 = vld [vmem:[#allocation6 + $0x48] sm:$0xff]
    %v86 = vld [vmem:[#allocation6 + $0x50] sm:$0xff]
    %v87 = vld [vmem:[#allocation6 + $0x58] sm:$0xff]
    %v88 = vld [vmem:[#allocation6 + $0x60] sm:$0xff]
    %v89 = vld [vmem:[#allocation6 + $0x68] sm:$0xff]
    %v90 = vld [vmem:[#allocation6 + $0x70] sm:$0xff]
    %v91 = vld [vmem:[#allocation6 + $0x78] sm:$0xff]
    %v92 = vld [vmem:[%s2] sm:$0x1]
    %v94 = vlaneseq
    %v95 = vshrl.u32 %v94, 7
    %v96 = vsub.s32 0, %v95
    %v97 = vrot.slane %v92, %v96
    %99 = vmatprep.subr.mxu0 0.0
    %100 = vmatpush1.msra.mxu0 %v76
    %101 = vmatprep.subr.mxu0 0.0
    %102 = vmatpush1.msra.mxu0 %v77
    %103 = vmatprep.subr.mxu0 0.0
    %104 = vmatpush1.msra.mxu0 %v78
    %105 = vmatprep.subr.mxu0 0.0
    %106 = vmatpush1.msra.mxu0 %v79
    %107 = vmatprep.subr.mxu0 0.0
    %108 = vmatpush1.msra.mxu0 %v80
    %109 = vmatprep.subr.mxu0 0.0
    %110 = vmatpush1.msra.mxu0 %v81
    %111 = vmatprep.subr.mxu0 0.0
    %112 = vmatpush1.msra.mxu0 %v82
    %113 = vmatprep.subr.mxu0 0.0
    %114 = vmatpush1.msra.mxu0 %v83
    %115 = vmatprep.subr.mxu0 0.0
    %116 = vmatpush1.msra.mxu0 %v84
    %117 = vmatprep.subr.mxu0 0.0
    %118 = vmatpush1.msra.mxu0 %v85
    %119 = vmatprep.subr.mxu0 0.0
    %120 = vmatpush1.msra.mxu0 %v86
    %121 = vmatprep.subr.mxu0 0.0
    %122 = vmatpush1.msra.mxu0 %v87
    %123 = vmatprep.subr.mxu0 0.0
    %124 = vmatpush1.msra.mxu0 %v88
    %125 = vmatprep.subr.mxu0 0.0
    %126 = vmatpush1.msra.mxu0 %v89
    %127 = vmatprep.subr.mxu0 0.0
    %128 = vmatpush1.msra.mxu0 %v90
    %129 = vmatprep.subr.mxu0 0.0
    %130 = vmatpush1.msra.mxu0 %v91
    %131 = vmatprep.subr.mxu0 0.0
    %132 = vmatpush1.msra.mxu0 0.0
    %133 = vmatprep.subr.mxu0 0.0
    %134 = vmatpush1.msra.mxu0 0.0
    %135 = vmatprep.subr.mxu0 0.0
    %136 = vmatpush1.msra.mxu0 0.0
    %137 = vmatprep.subr.mxu0 0.0
    %138 = vmatpush1.msra.mxu0 0.0
    %139 = vmatprep.subr.mxu0 0.0
    %140 = vmatpush1.msra.mxu0 0.0
    %141 = vmatprep.subr.mxu0 0.0
    %142 = vmatpush1.msra.mxu0 0.0
    %143 = vmatprep.subr.mxu0 0.0
    %144 = vmatpush1.msra.mxu0 0.0
    %145 = vmatprep.subr.mxu0 0.0
    %146 = vmatpush1.msra.mxu0 0.0
    %147 = vmatprep.subr.mxu0 0.0
    %148 = vmatpush1.msra.mxu0 0.0
    %149 = vmatprep.subr.mxu0 0.0
    %150 = vmatpush1.msra.mxu0 0.0
    %151 = vmatprep.subr.mxu0 0.0
    %152 = vmatpush1.msra.mxu0 0.0
    %153 = vmatprep.subr.mxu0 0.0
    %154 = vmatpush1.msra.mxu0 0.0
    %155 = vmatprep.subr.mxu0 0.0
    %156 = vmatpush1.msra.mxu0 0.0
    %157 = vmatprep.subr.mxu0 0.0
    %158 = vmatpush1.msra.mxu0 0.0
    %159 = vmatprep.subr.mxu0 0.0
    %160 = vmatpush1.msra.mxu0 0.0
    %161 = vmatprep.subr.mxu0 0.0
    %162 = vmatpush1.msra.mxu0 0.0
    %163 = vmatprep.mubr.f32.mxu0 0.0
    %164 = vmatmul.mubr.f32.gmra.mrb[0].mxu0 %v74
    %v165 = vpop.f32.mrb[0].mxu0
    %v166 = vadd.f32 %v97, %v165
    %v167 = vpop.f32.mrb[0].mxu0
    %168 = vmatprep.mubr.f32.mxu0 0.0
    %169 = vmatmul.mubr.f32.gmra.mrb[0].mxu0 %v75
    %v170 = vpop.f32.mrb[0].mxu0
    %v171 = vadd.f32 %v97, %v170
    %v172 = vpop.f32.mrb[0].mxu0
    %173 = vdwg.mxu0
    %v174 = vmax.f32 %v166, 0.0
    %v175 = vmax.f32 %v171, 0.0
    %v176 = vld [vmem:[#allocation2] sm:$0xff]
    %v177 = vld [vmem:[#allocation2 + $0x8] sm:$0xff]
    %v178 = vld [vmem:[#allocation8] sm:$0xff]
    %v179 = vld [vmem:[#allocation8 + $0x8] sm:$0xff]
    %v180 = vld [vmem:[#allocation8 + $0x10] sm:$0xff]
    %v181 = vld [vmem:[#allocation8 + $0x18] sm:$0xff]
    %v182 = vld [vmem:[#allocation8 + $0x20] sm:$0xff]
    %v183 = vld [vmem:[#allocation8 + $0x28] sm:$0xff]
    %v184 = vld [vmem:[#allocation8 + $0x30] sm:$0xff]
    %v185 = vld [vmem:[#allocation8 + $0x38] sm:$0xff]
    %v186 = vld [vmem:[#allocation8 + $0x40] sm:$0xff]
    %v187 = vld [vmem:[#allocation8 + $0x48] sm:$0xff]
    %v188 = vld [vmem:[#allocation8 + $0x50] sm:$0xff]
    %v189 = vld [vmem:[#allocation8 + $0x58] sm:$0xff]
    %v190 = vld [vmem:[#allocation8 + $0x60] sm:$0xff]
    %v191 = vld [vmem:[#allocation8 + $0x68] sm:$0xff]
    %v192 = vld [vmem:[#allocation8 + $0x70] sm:$0xff]
    %v193 = vld [vmem:[#allocation8 + $0x78] sm:$0xff]
    %194 = vmatprep.subr.mxu0 0.0
    %195 = vmatpush1.msra.mxu0 %v178
    %196 = vmatprep.subr.mxu0 0.0
    %197 = vmatpush1.msra.mxu0 %v179
    %198 = vmatprep.subr.mxu0 0.0
    %199 = vmatpush1.msra.mxu0 %v180
    %200 = vmatprep.subr.mxu0 0.0
    %201 = vmatpush1.msra.mxu0 %v181
    %202 = vmatprep.subr.mxu0 0.0
    %203 = vmatpush1.msra.mxu0 %v182
    %204 = vmatprep.subr.mxu0 0.0
    %205 = vmatpush1.msra.mxu0 %v183
    %206 = vmatprep.subr.mxu0 0.0
    %207 = vmatpush1.msra.mxu0 %v184
    %208 = vmatprep.subr.mxu0 0.0
    %209 = vmatpush1.msra.mxu0 %v185
    %210 = vmatprep.subr.mxu0 0.0
    %211 = vmatpush1.msra.mxu0 %v186
    %212 = vmatprep.subr.mxu0 0.0
    %213 = vmatpush1.msra.mxu0 %v187
    %214 = vmatprep.subr.mxu0 0.0
    %215 = vmatpush1.msra.mxu0 %v188
    %216 = vmatprep.subr.mxu0 0.0
    %217 = vmatpush1.msra.mxu0 %v189
    %218 = vmatprep.subr.mxu0 0.0
    %219 = vmatpush1.msra.mxu0 %v190
    %220 = vmatprep.subr.mxu0 0.0
    %221 = vmatpush1.msra.mxu0 %v191
    %222 = vmatprep.subr.mxu0 0.0
    %223 = vmatpush1.msra.mxu0 %v192
    %224 = vmatprep.subr.mxu0 0.0
    %225 = vmatpush1.msra.mxu0 %v193
    %226 = vmatprep.subr.mxu0 0.0
    %227 = vmatpush1.msra.mxu0 0.0
    %228 = vmatprep.subr.mxu0 0.0
    %229 = vmatpush1.msra.mxu0 0.0
    %230 = vmatprep.subr.mxu0 0.0
    %231 = vmatpush1.msra.mxu0 0.0
    %232 = vmatprep.subr.mxu0 0.0
    %233 = vmatpush1.msra.mxu0 0.0
    %234 = vmatprep.subr.mxu0 0.0
    %235 = vmatpush1.msra.mxu0 0.0
    %236 = vmatprep.subr.mxu0 0.0
    %237 = vmatpush1.msra.mxu0 0.0
    %238 = vmatprep.subr.mxu0 0.0
    %239 = vmatpush1.msra.mxu0 0.0
    %240 = vmatprep.subr.mxu0 0.0
    %241 = vmatpush1.msra.mxu0 0.0
    %242 = vmatprep.subr.mxu0 0.0
    %243 = vmatpush1.msra.mxu0 0.0
    %244 = vmatprep.subr.mxu0 0.0
    %245 = vmatpush1.msra.mxu0 0.0
    %246 = vmatprep.subr.mxu0 0.0
    %247 = vmatpush1.msra.mxu0 0.0
    %248 = vmatprep.subr.mxu0 0.0
    %249 = vmatpush1.msra.mxu0 0.0
    %250 = vmatprep.subr.mxu0 0.0
    %251 = vmatpush1.msra.mxu0 0.0
    %252 = vmatprep.subr.mxu0 0.0
    %253 = vmatpush1.msra.mxu0 0.0
    %254 = vmatprep.subr.mxu0 0.0
    %255 = vmatpush1.msra.mxu0 0.0
    %256 = vmatprep.subr.mxu0 0.0
    %257 = vmatpush1.msra.mxu0 0.0
    %258 = vmatprep.mubr.f32.mxu0 0.0
    %259 = vmatmul.mubr.f32.gmra.mrb[0].mxu0 %v174
    %v260 = vpop.f32.mrb[0].mxu0
    %v261 = vadd.f32 0.0, %v260
    %v262 = vpop.f32.mrb[0].mxu0
    %263 = vmatprep.mubr.f32.mxu0 0.0
    %264 = vmatmul.mubr.f32.gmra.mrb[0].mxu0 %v175
    %v265 = vpop.f32.mrb[0].mxu0
    %v266 = vadd.f32 0.0, %v265
    %v267 = vpop.f32.mrb[0].mxu0
    %268 = vdwg.mxu0
    %v269 = vadd.f32 %v176, %v261
    %v270 = vadd.f32 %v177, %v266
    %271 = vst [vmem:[#allocation2] sm:$0xff] %v269
    %272 = vst [vmem:[#allocation2 + $0x8] sm:$0xff] %v270
    // Predicated region
    $region46: #{tpu_custom_call.1} parent=1 // pred_check
      %p273 = pneg %p68
    $region47: #{tpu_custom_call.1} parent=1 // pred_check_branch
      %275 = sbr.rel (%p273) target = $region49
    $region48: #{tpu_custom_call.1} parent=1 // pred_region
      %v276 = vld [vmem:[#allocation2] sm:$0xff]
      %v277 = vld [vmem:[#allocation2 + $0x8] sm:$0xff]
      %v278 = vld [vmem:[%s4] sm:$0x1]
      %v280 = vlaneseq
      %v281 = vshrl.u32 %v280, 7
      %v282 = vsub.s32 0, %v281
      %v283 = vrot.slane %v278, %v282
      %v285 = vadd.f32 %v276, %v283
      %v286 = vadd.f32 %v277, %v283
      %v287 = vadd.f32 %v285, %v74
      %v288 = vadd.f32 %v286, %v75
      %289 = vadd.xlane.f32.xlu0 %v287
      %v290 = vpop.xlane.xlu0 %289
      %291 = vadd.xlane.f32.xlu0 %v288
      %v292 = vpop.xlane.xlu0 %291
      %v293 = vmul.f32 %v290, 0.03125
      %v294 = vmul.f32 %v292, 0.03125
      %v295 = vsub.f32 %v287, %v293
      %v296 = vsub.f32 %v288, %v294
      %v297 = vmul.f32 %v295, %v295
      %v298 = vmul.f32 %v296, %v296
      %299 = vadd.xlane.f32.xlu0 %v297
      %v300 = vpop.xlane.xlu0 %299
      %301 = vadd.xlane.f32.xlu0 %v298
      %v302 = vpop.xlane.xlu0 %301
      %v303 = vmul.f32 %v293, 96.0
      %v304 = vmul.f32 %v294, 96.0
      %v305 = vmul.f32 %v303, %v293
      %v306 = vmul.f32 %v304, %v294
      %v307 = vsub.f32 %v300, %v305
      %v308 = vsub.f32 %v302, %v306
      %v309 = vmul.f32 %v307, 0.03125
      %v310 = vmul.f32 %v308, 0.03125
      %v311 = vadd.f32 %v309, 1e-05
      %v312 = vadd.f32 %v310, 1e-05
      %v313 = vrsqrt.pop %v311
      %v314 = vrsqrt.pop %v312
      %v315 = vmul.f32 %v295, %v313
      %v316 = vmul.f32 %v296, %v314
      %v317 = vld [vmem:[%s5] sm:$0x1]
      %v319 = vlaneseq
      %v320 = vshrl.u32 %v319, 7
      %v321 = vsub.s32 0, %v320
      %v322 = vrot.slane %v317, %v321
      %v324 = vmul.f32 %v315, %v322
      %v325 = vmul.f32 %v316, %v322
      %v326 = vld [vmem:[%s6] sm:$0x1]
      %v328 = vlaneseq
      %v329 = vshrl.u32 %v328, 7
      %v330 = vsub.s32 0, %v329
      %v331 = vrot.slane %v326, %v330
      %v333 = vadd.f32 %v324, %v331
      %v334 = vadd.f32 %v325, %v331
      %335 = vst [vmem:[#allocation9] sm:$0xff] %v333
      %336 = vst [vmem:[#allocation9 + $0x8] sm:$0xff] %v334
    $region49: #{tpu_custom_call.1} parent=1 // pred_fallthru
      _
    // Predicated region
    $region50: #{tpu_custom_call.1} parent=1 // pred_check
      _
    $region51: #{tpu_custom_call.1} parent=1 // pred_check_branch
      %338 = sbr.rel (0) target = $region53
    $region52: #{tpu_custom_call.1} parent=1 // pred_region
      %s340 = ssub.s32 256, 256
      %341 = vsyncadd [#allocation5], %s340
      %s342 = sshll.u32 [#allocation9], 4
      %s343 = int_to_ptr.vmem [resolvable:$true] %s342
      %348 = dma.vmem_to_hbm [thread:$0]  %s343, 256, %s7, [#allocation5], 128, 128, 8
    $region53: #{tpu_custom_call.1} parent=1 // pred_fallthru
      _
    // Predicated region
    $region54: #{tpu_custom_call.1} parent=1 // pred_check
      _
    $region55: #{tpu_custom_call.1} parent=1 // pred_check_branch
      %350 = sbr.rel (0) target = $region57
    $region56: #{tpu_custom_call.1} parent=1 // pred_region
      %351 = dma.done [#allocation5], 256
    $region57: #{tpu_custom_call.1} parent=1 // pred_fallthru
      _
    %352 = vsyncpa [#allocation4], 1
    %353 = vsyncpa [#allocation7], 1
    %354 = vsyncpa [#allocation5], 1

</llo_original>
